<compile_context>
chip_gen: v6e
topology: v6e:2x2x1
jax: 0.10.0
libtpu: 0.0.40
codegen_flags: <defaults>
</compile_context>

<pallas_src>
import functools
import math

import numpy as np

import jax
import jax.numpy as jnp
from jax.experimental import pallas as pl
from jax.experimental.pallas import tpu as pltpu


def _avgpool_shortcut_kernel(p_ref, x_ref, o_ref, *, b_tile, in_c, out_c, inv_k2):
    # p_ref: (H*W, Ho*Wo)    0/1 pooling matrix, input dtype, VMEM-resident
    # x_ref: (B*in_c, H*W)   B images with batch+channels merged into rows
    # o_ref: (B*out_c, Ho*Wo)
    pooled = jnp.dot(x_ref[...], p_ref[...],
                     preferred_element_type=jnp.float32)      # (B*in_c, Ho*Wo)
    if inv_k2 != 1.0:
        pooled = pooled * inv_k2          # scale the f32 accumulator (P stays 0/1)
    pooled = pooled.astype(o_ref.dtype)

    if out_c == in_c:
        o_ref[...] = pooled               # rows already line up: one full store
        return

    howo = o_ref.shape[1]
    zeros = jnp.zeros((out_c - in_c, howo), o_ref.dtype)      # hoisted once
    for b in range(b_tile):               # two direct stores per image
        o_ref[pl.ds(b * out_c, in_c), :] = pooled[b * in_c:(b + 1) * in_c, :]
        o_ref[pl.ds(b * out_c + in_c, out_c - in_c), :] = zeros


def _pick_batch_tile(n, in_c, out_c, hw, howo, itemsize):
    """Images per grid step: amortize step overhead, fill the MXU, fit VMEM."""
    sublane = {4: 8, 2: 16, 1: 32}.get(itemsize, 8)

    def _align(c):  # smallest f such that f*c is a multiple of the sublane tile
        return sublane // math.gcd(c, sublane)

    ai, ao = _align(in_c), _align(out_c)
    b_align = ai * ao // math.gcd(ai, ao)     # keeps both block row dims aligned

    # Target: >=256 matmul rows and >=1 MiB input block per step ...
    b_target = max(-(-256 // in_c), -(-(1 << 20) // (in_c * hw * itemsize)))
    # ... but keep >=2 grid steps when the batch allows it (v7x: 2 TCs/chip).
    if n >= 2 * b_align:
        b_target = min(b_target, -(-n // 2))

    # VMEM budget (v7x 64 MiB/TC safe): 2x in block + 2x out block + P <= ~48 MiB.
    per_img = 2 * (in_c * hw + out_c * howo) * itemsize
    p_bytes = hw * howo * itemsize
    b_mem = max(1, ((48 << 20) - p_bytes) // max(per_img, 1))

    b = max(1, min(b_target, n, b_mem))
    b = max(b_align, (b // b_align) * b_align)
    return b


def avg_pool_shortcut(x_nchw, *, stride, out_c, in_c):
    n, c, h, w = x_nchw.shape
    assert c == in_c
    assert out_c >= in_c

    # kernel size (square), matching the PyTorch branch on odd H
    k = 1 if (h % 2 != 0) else stride
    h_out = (h - k) // stride + 1
    w_out = (w - k) // stride + 1
    hw, howo = h * w, h_out * w_out
    itemsize = jnp.dtype(x_nchw.dtype).itemsize

    # Host-side (numpy) compile-time constant 0/1 pooling matrix in input dtype:
    # P[sh*W+sw, dh*Wo+dw] = 1 iff source pixel (sh, sw) lies inside the k x k
    # window of output pixel (dh, dw).  1/k^2 is applied in-kernel in f32.
    src, dst = np.arange(hw), np.arange(howo)
    sh, sw = src // w, src % w
    dh, dw = dst // w_out, dst % w_out
    in_win = ((sh[:, None] >= dh[None, :] * stride) &
              (sh[:, None] < dh[None, :] * stride + k) &
              (sw[:, None] >= dw[None, :] * stride) &
              (sw[:, None] < dw[None, :] * stride + k))
    p_mat = jnp.asarray(in_win.astype(np.float32), dtype=x_nchw.dtype)

    b_tile = _pick_batch_tile(n, in_c, out_c, hw, howo, itemsize)
    n_pad = -(-n // b_tile) * b_tile
    grid_steps = n_pad // b_tile

    x2d = x_nchw.reshape(n * in_c, hw)                         # free reshape
    if n_pad != n:                                             # ragged batch
        x2d = jnp.pad(x2d, ((0, (n_pad - n) * in_c), (0, 0)))

    kernel = functools.partial(_avgpool_shortcut_kernel, b_tile=b_tile,
                               in_c=in_c, out_c=out_c, inv_k2=1.0 / float(k * k))

    cost = pl.CostEstimate(
        flops=2 * n_pad * in_c * hw * howo,
        transcendentals=0,
        bytes_accessed=(n_pad * in_c * hw + n_pad * out_c * howo
                        + hw * howo) * itemsize)

    need = (2 * b_tile * (in_c * hw + out_c * howo) + 2 * hw * howo) * itemsize
    vmem_limit = int(min(64 << 20, max(32 << 20, need + (4 << 20))))

    def _p_spec(single_buffer):
        if single_buffer:
            return pl.BlockSpec((hw, howo), lambda i: (0, 0),
                                pipeline_mode=pl.Buffered(1))
        return pl.BlockSpec((hw, howo), lambda i: (0, 0))

    def _call(single_buffer_p):
        return pl.pallas_call(
            kernel,
            out_shape=jax.ShapeDtypeStruct((n_pad * out_c, howo), x_nchw.dtype),
            grid=(grid_steps,),
            in_specs=[
                _p_spec(single_buffer_p),                         # VMEM-resident P
                pl.BlockSpec((b_tile * in_c, hw), lambda i: (i, 0)),
            ],
            out_specs=pl.BlockSpec((b_tile * out_c, howo), lambda i: (i, 0)),
            compiler_params=pltpu.CompilerParams(
                dimension_semantics=("parallel",),
                vmem_limit_bytes=vmem_limit),
            cost_estimate=cost,
        )(p_mat, x2d)

    try:
        out2d = _call(True)     # single-buffered P (fetched once)
    except Exception:           # jax build without pipeline_mode on the TPU grid
        out2d = _call(False)

    out2d = out2d[:n * out_c]                                  # drop batch padding
    return out2d.reshape(n, out_c, h_out, w_out)               # NCHW output (free)


def _reference(x_nchw, *, stride, out_c, in_c):
    n, c, h, w = x_nchw.shape
    k = 1 if (h % 2 != 0) else stride
    summed = jax.lax.reduce_window(
        x_nchw, 0.0, jax.lax.add,
        window_dimensions=(1, 1, k, k),
        window_strides=(1, 1, stride, stride),
        padding="VALID")
    pooled = summed / float(k * k)
    pad = jnp.zeros((n, out_c - in_c, pooled.shape[2], pooled.shape[3]),
                    x_nchw.dtype)
    return jnp.concatenate([pooled, pad], axis=1)


if __name__ == "__main__":
    stride, in_c, out_c = 2, 4, 8
    key_even, key_odd, key_rag = jax.random.split(jax.random.PRNGKey(0), 3)

    # even spatial size -> avg_pool2d(stride, stride) branch
    x_even = jax.random.normal(key_even, (2, in_c, 16, 16), dtype=jnp.float32)
    y_even = jax.block_until_ready(
        avg_pool_shortcut(x_even, stride=stride, out_c=out_c, in_c=in_c))
    r_even = _reference(x_even, stride=stride, out_c=out_c, in_c=in_c)
    assert y_even.shape == r_even.shape
    assert float(jnp.max(jnp.abs(y_even - r_even))) < 1e-5

    # odd spatial size -> avg_pool2d(1, stride) branch (pure subsampling)
    x_odd = jax.random.normal(key_odd, (2, in_c, 15, 15), dtype=jnp.float32)
    y_odd = jax.block_until_ready(
        avg_pool_shortcut(x_odd, stride=stride, out_c=out_c, in_c=in_c))
    r_odd = _reference(x_odd, stride=stride, out_c=out_c, in_c=in_c)
    assert y_odd.shape == r_odd.shape
    assert float(jnp.max(jnp.abs(y_odd - r_odd))) < 1e-5

    # batch not divisible by the batch tile -> exercises padding + 2 grid steps
    x_rag = jax.random.normal(key_rag, (3, in_c, 16, 16), dtype=jnp.float32)
    y_rag = jax.block_until_ready(
        avg_pool_shortcut(x_rag, stride=stride, out_c=out_c, in_c=in_c))
    r_rag = _reference(x_rag, stride=stride, out_c=out_c, in_c=in_c)
    assert y_rag.shape == r_rag.shape
    assert float(jnp.max(jnp.abs(y_rag - r_rag))) < 1e-5

    print("KERNEL_OK")
</pallas_src>

<mosaic_0001>
module attributes {stable_mosaic.version = 11 : i64} {
  func.func @_avgpool_shortcut_kernel(%arg0: i32, %arg1: memref<256x64xf32, #tpu.memory_space<vmem>>, %arg2: memref<8x256xf32, #tpu.memory_space<vmem>>, %arg3: memref<16x64xf32, #tpu.memory_space<vmem>>) attributes {dimension_semantics = [#tpu.dimension_semantics<parallel>], iteration_bounds = array<i64: 1>, scalar_prefetch = 0 : i64, scratch_operands = 0 : i64, tpu.core_type = #tpu.core_type<tc>, window_params = [{pipeline_mode = #tpu.pipeline_mode<synchronous>, transform_indices = @transform_0, window_bounds = array<i64: 256, 64>}, {transform_indices = @transform_1, window_bounds = array<i64: 8, 256>}, {transform_indices = @transform_2, window_bounds = array<i64: 16, 64>}]} {
    %c0 = arith.constant 0 : index
    %c0_0 = arith.constant 0 : index
    %0 = vector.load %arg2[%c0, %c0_0] : memref<8x256xf32, #tpu.memory_space<vmem>>, vector<8x256xf32>
    %c0_1 = arith.constant 0 : index
    %c0_2 = arith.constant 0 : index
    %1 = vector.load %arg1[%c0_1, %c0_2] : memref<256x64xf32, #tpu.memory_space<vmem>>, vector<256x64xf32>
    %cst = arith.constant dense<0.000000e+00> : vector<8x64xf32>
    %2 = tpu.matmul %0, %1, %cst {dimension_numbers = #tpu.dot_dimension_numbers<[1], [0], [0], [1], [0, 0, 1, 1], [], []>} : vector<8x256xf32>, vector<256x64xf32>, vector<8x64xf32> -> vector<8x64xf32>
    %cst_3 = arith.constant 2.500000e-01 : f32
    %3 = vector.broadcast %cst_3 : f32 to vector<8x64xf32>
    %4 = arith.mulf %2, %3 : vector<8x64xf32>
    %cst_4 = arith.constant 0.000000e+00 : f32
    %5 = vector.broadcast %cst_4 : f32 to vector<4x64xf32>
    %6 = vector.extract_strided_slice %4 {offsets = [0, 0], sizes = [4, 64], strides = [1, 1]} : vector<8x64xf32> to vector<4x64xf32>
    %c0_5 = arith.constant 0 : index
    %c0_6 = arith.constant 0 : index
    %7 = vector.load %arg3[%c0_5, %c0_6] : memref<16x64xf32, #tpu.memory_space<vmem>>, vector<4x64xf32>
    tpu.vector_store %arg3[%c0_5, %c0_6], %6 {strides = array<i32>} : memref<16x64xf32, #tpu.memory_space<vmem>>, vector<4x64xf32>,
    %c4 = arith.constant 4 : index
    %c0_7 = arith.constant 0 : index
    %8 = vector.load %arg3[%c4, %c0_7] : memref<16x64xf32, #tpu.memory_space<vmem>>, vector<4x64xf32>
    tpu.vector_store %arg3[%c4, %c0_7], %5 {strides = array<i32>} : memref<16x64xf32, #tpu.memory_space<vmem>>, vector<4x64xf32>,
    %9 = vector.extract_strided_slice %4 {offsets = [4, 0], sizes = [4, 64], strides = [1, 1]} : vector<8x64xf32> to vector<4x64xf32>
    %c8 = arith.constant 8 : index
    %c0_8 = arith.constant 0 : index
    %10 = vector.load %arg3[%c8, %c0_8] : memref<16x64xf32, #tpu.memory_space<vmem>>, vector<4x64xf32>
    tpu.vector_store %arg3[%c8, %c0_8], %9 {strides = array<i32>} : memref<16x64xf32, #tpu.memory_space<vmem>>, vector<4x64xf32>,
    %c12 = arith.constant 12 : index
    %c0_9 = arith.constant 0 : index
    %11 = vector.load %arg3[%c12, %c0_9] : memref<16x64xf32, #tpu.memory_space<vmem>>, vector<4x64xf32>
    tpu.vector_store %arg3[%c12, %c0_9], %5 {strides = array<i32>} : memref<16x64xf32, #tpu.memory_space<vmem>>, vector<4x64xf32>,
    return
  }
  func.func @transform_0(%arg0: i32) -> (i32, i32) {
    %c0_i32 = arith.constant 0 : i32
    %c0_i32_0 = arith.constant 0 : i32
    %c0_i32_1 = arith.constant 0 : i32
    return %c0_i32, %c0_i32_0 : i32, i32
  }
  func.func @transform_1(%arg0: i32) -> (i32, i32) {
    %c0_i32 = arith.constant 0 : i32
    %c0_i32_0 = arith.constant 0 : i32
    return %arg0, %c0_i32 : i32, i32
  }
  func.func @transform_2(%arg0: i32) -> (i32, i32) {
    %c0_i32 = arith.constant 0 : i32
    %c0_i32_0 = arith.constant 0 : i32
    return %arg0, %c0_i32 : i32, i32
  }
}

module attributes {stable_mosaic.version = 11 : i64} {
  func.func @_avgpool_shortcut_kernel(%arg0: i32, %arg1: memref<256x64xf32, #tpu.memory_space<vmem>>, %arg2: memref<8x256xf32, #tpu.memory_space<vmem>>, %arg3: memref<16x64xf32, #tpu.memory_space<vmem>>) attributes {dimension_semantics = [#tpu.dimension_semantics<parallel>], iteration_bounds = array<i64: 1>, scalar_prefetch = 0 : i64, scratch_operands = 0 : i64, tpu.core_type = #tpu.core_type<tc>, window_params = [{pipeline_mode = #tpu.pipeline_mode<synchronous>, transform_indices = @transform_0, window_bounds = array<i64: 256, 64>}, {transform_indices = @transform_1, window_bounds = array<i64: 8, 256>}, {transform_indices = @transform_2, window_bounds = array<i64: 16, 64>}]} {
    %c0 = arith.constant 0 : index
    %c0_0 = arith.constant 0 : index
    %0 = vector.load %arg2[%c0, %c0_0] : memref<8x256xf32, #tpu.memory_space<vmem>>, vector<8x256xf32>
    %c0_1 = arith.constant 0 : index
    %c0_2 = arith.constant 0 : index
    %1 = vector.load %arg1[%c0_1, %c0_2] : memref<256x64xf32, #tpu.memory_space<vmem>>, vector<256x64xf32>
    %cst = arith.constant dense<0.000000e+00> : vector<8x64xf32>
    %2 = tpu.matmul %0, %1, %cst {dimension_numbers = #tpu.dot_dimension_numbers<[1], [0], [0], [1], [0, 0, 1, 1], [], []>} : vector<8x256xf32>, vector<256x64xf32>, vector<8x64xf32> -> vector<8x64xf32>
    %cst_3 = arith.constant 2.500000e-01 : f32
    %3 = vector.broadcast %cst_3 : f32 to vector<8x64xf32>
    %4 = arith.mulf %2, %3 : vector<8x64xf32>
    %cst_4 = arith.constant 0.000000e+00 : f32
    %5 = vector.broadcast %cst_4 : f32 to vector<4x64xf32>
    %6 = vector.extract_strided_slice %4 {offsets = [0, 0], sizes = [4, 64], strides = [1, 1]} : vector<8x64xf32> to vector<4x64xf32>
    %c0_5 = arith.constant 0 : index
    %c0_6 = arith.constant 0 : index
    %7 = vector.load %arg3[%c0_5, %c0_6] : memref<16x64xf32, #tpu.memory_space<vmem>>, vector<4x64xf32>
    tpu.vector_store %arg3[%c0_5, %c0_6], %6 {strides = array<i32>} : memref<16x64xf32, #tpu.memory_space<vmem>>, vector<4x64xf32>,
    %c4 = arith.constant 4 : index
    %c0_7 = arith.constant 0 : index
    %8 = vector.load %arg3[%c4, %c0_7] : memref<16x64xf32, #tpu.memory_space<vmem>>, vector<4x64xf32>
    tpu.vector_store %arg3[%c4, %c0_7], %5 {strides = array<i32>} : memref<16x64xf32, #tpu.memory_space<vmem>>, vector<4x64xf32>,
    %9 = vector.extract_strided_slice %4 {offsets = [4, 0], sizes = [4, 64], strides = [1, 1]} : vector<8x64xf32> to vector<4x64xf32>
    %c8 = arith.constant 8 : index
    %c0_8 = arith.constant 0 : index
    %10 = vector.load %arg3[%c8, %c0_8] : memref<16x64xf32, #tpu.memory_space<vmem>>, vector<4x64xf32>
    tpu.vector_store %arg3[%c8, %c0_8], %9 {strides = array<i32>} : memref<16x64xf32, #tpu.memory_space<vmem>>, vector<4x64xf32>,
    %c12 = arith.constant 12 : index
    %c0_9 = arith.constant 0 : index
    %11 = vector.load %arg3[%c12, %c0_9] : memref<16x64xf32, #tpu.memory_space<vmem>>, vector<4x64xf32>
    tpu.vector_store %arg3[%c12, %c0_9], %5 {strides = array<i32>} : memref<16x64xf32, #tpu.memory_space<vmem>>, vector<4x64xf32>,
    return
  }
  func.func @transform_0(%arg0: i32) -> (i32, i32) {
    %c0_i32 = arith.constant 0 : i32
    %c0_i32_0 = arith.constant 0 : i32
    %c0_i32_1 = arith.constant 0 : i32
    return %c0_i32, %c0_i32_0 : i32, i32
  }
  func.func @transform_1(%arg0: i32) -> (i32, i32) {
    %c0_i32 = arith.constant 0 : i32
    %c0_i32_0 = arith.constant 0 : i32
    return %arg0, %c0_i32 : i32, i32
  }
  func.func @transform_2(%arg0: i32) -> (i32, i32) {
    %c0_i32 = arith.constant 0 : i32
    %c0_i32_0 = arith.constant 0 : i32
    return %arg0, %c0_i32 : i32, i32
  }
}

</mosaic_0001>

<llo_original>
// kernel: tpu_custom_call.1
$region0: #{tpu_custom_call.1}
  #allocation0 [shape = 'u32[]', space=smem, size = 0x4, offset = 0x4, fixed_abs, tag = 'smem constant byte address 0x4 - core index']
  #allocation1 [shape = 'u32[144,128]{1,0:T(1,128)}', space=vmem, size = 0x12000, scoped, tag = 'internal scratch']
  %s0 = inlined_call_operand.vmem [shape: f32[256,64], index: 0, kind: input, shape index: {}]
  %s1 = inlined_call_operand.vmem [shape: f32[8,256], index: 1, kind: input, shape index: {}]
  %s2 = inlined_call_operand.hbm [shape: f32[16,64], index: 2, kind: output, shape index: {}]
  %s3 = sld [smem:[#allocation0]]
  $region18: #{tpu_custom_call.1} parent=0
    _
  %s5 = ssub.s32 1, %s3
  %s6 = scalar_select 0, %s5, %s3
  $region1: #{tpu_custom_call.1} parent=0
    #allocation2 [shape = 'u8[8192]{0}', space=vmem, size = 0x2000, scoped, tag = 'output window, operand 0, single buffered']
    #allocation3 [shape = 's32[1]{0}', space=sflag, size = 0x4, scoped, tag = 'scoped memory for tpu_custom_call.1']
    %7 = vsyncpa [#allocation3], 0
    // Predicated region
    $region2: #{tpu_custom_call.1} parent=1 // pred_check
      _
    $region3: #{tpu_custom_call.1} parent=1 // pred_check_branch
      %9 = sbr.rel (0) target = $region5
    $region4: #{tpu_custom_call.1} parent=1 // pred_region
      _
    $region5: #{tpu_custom_call.1} parent=1 // pred_fallthru
      _
    // Predicated region
    $region6: #{tpu_custom_call.1} parent=1 // pred_check
      _
    $region7: #{tpu_custom_call.1} parent=1 // pred_check_branch
      %11 = sbr.rel (0) target = $region9
    $region8: #{tpu_custom_call.1} parent=1 // pred_region
      _
    $region9: #{tpu_custom_call.1} parent=1 // pred_fallthru
      _
    %v12 = vld [vmem:[%s1] sm:$0xff]
    %v13 = vld [vmem:[%s1 + $0x8] sm:$0xff]
    %v14 = vld [vmem:[%s0] sm:$0xff]
    %v15 = vld [vmem:[%s0 + $0x8] sm:$0xff]
    %v16 = vld [vmem:[%s0 + $0x10] sm:$0xff]
    %v17 = vld [vmem:[%s0 + $0x18] sm:$0xff]
    %v18 = vld [vmem:[%s0 + $0x20] sm:$0xff]
    %v19 = vld [vmem:[%s0 + $0x28] sm:$0xff]
    %v20 = vld [vmem:[%s0 + $0x30] sm:$0xff]
    %v21 = vld [vmem:[%s0 + $0x38] sm:$0xff]
    %v22 = vld [vmem:[%s0 + $0x40] sm:$0xff]
    %v23 = vld [vmem:[%s0 + $0x48] sm:$0xff]
    %v24 = vld [vmem:[%s0 + $0x50] sm:$0xff]
    %v25 = vld [vmem:[%s0 + $0x58] sm:$0xff]
    %v26 = vld [vmem:[%s0 + $0x60] sm:$0xff]
    %v27 = vld [vmem:[%s0 + $0x68] sm:$0xff]
    %v28 = vld [vmem:[%s0 + $0x70] sm:$0xff]
    %v29 = vld [vmem:[%s0 + $0x78] sm:$0xff]
    %v30 = vld [vmem:[%s0 + $0x80] sm:$0xff]
    %v31 = vld [vmem:[%s0 + $0x88] sm:$0xff]
    %v32 = vld [vmem:[%s0 + $0x90] sm:$0xff]
    %v33 = vld [vmem:[%s0 + $0x98] sm:$0xff]
    %v34 = vld [vmem:[%s0 + $0xa0] sm:$0xff]
    %v35 = vld [vmem:[%s0 + $0xa8] sm:$0xff]
    %v36 = vld [vmem:[%s0 + $0xb0] sm:$0xff]
    %v37 = vld [vmem:[%s0 + $0xb8] sm:$0xff]
    %v38 = vld [vmem:[%s0 + $0xc0] sm:$0xff]
    %v39 = vld [vmem:[%s0 + $0xc8] sm:$0xff]
    %v40 = vld [vmem:[%s0 + $0xd0] sm:$0xff]
    %v41 = vld [vmem:[%s0 + $0xd8] sm:$0xff]
    %v42 = vld [vmem:[%s0 + $0xe0] sm:$0xff]
    %v43 = vld [vmem:[%s0 + $0xe8] sm:$0xff]
    %v44 = vld [vmem:[%s0 + $0xf0] sm:$0xff]
    %v45 = vld [vmem:[%s0 + $0xf8] sm:$0xff]
    %46 = vmatprep.subr.mxu0 0.0
    %47 = vmatpush1.msra.mxu0 %v29
    %48 = vmatprep.subr.mxu0 0.0
    %49 = vmatpush1.msra.mxu0 %v28
    %50 = vmatprep.subr.mxu0 0.0
    %51 = vmatpush1.msra.mxu0 %v27
    %52 = vmatprep.subr.mxu0 0.0
    %53 = vmatpush1.msra.mxu0 %v26
    %54 = vmatprep.subr.mxu0 0.0
    %55 = vmatpush1.msra.mxu0 %v25
    %56 = vmatprep.subr.mxu0 0.0
    %57 = vmatpush1.msra.mxu0 %v24
    %58 = vmatprep.subr.mxu0 0.0
    %59 = vmatpush1.msra.mxu0 %v23
    %60 = vmatprep.subr.mxu0 0.0
    %61 = vmatpush1.msra.mxu0 %v22
    %62 = vmatprep.subr.mxu0 0.0
    %63 = vmatpush1.msra.mxu0 %v21
    %64 = vmatprep.subr.mxu0 0.0
    %65 = vmatpush1.msra.mxu0 %v20
    %66 = vmatprep.subr.mxu0 0.0
    %67 = vmatpush1.msra.mxu0 %v19
    %68 = vmatprep.subr.mxu0 0.0
    %69 = vmatpush1.msra.mxu0 %v18
    %70 = vmatprep.subr.mxu0 0.0
    %71 = vmatpush1.msra.mxu0 %v17
    %72 = vmatprep.subr.mxu0 0.0
    %73 = vmatpush1.msra.mxu0 %v16
    %74 = vmatprep.subr.mxu0 0.0
    %75 = vmatpush1.msra.mxu0 %v15
    %76 = vmatprep.subr.mxu0 0.0
    %77 = vmatpush1.msra.mxu0 %v14
    %78 = vmatprep.subr.mxu0 0.0
    %79 = vmatpush2.msra.mxu0 %v45
    %80 = vmatprep.subr.mxu0 0.0
    %81 = vmatpush2.msra.mxu0 %v44
    %82 = vmatprep.subr.mxu0 0.0
    %83 = vmatpush2.msra.mxu0 %v43
    %84 = vmatprep.subr.mxu0 0.0
    %85 = vmatpush2.msra.mxu0 %v42
    %86 = vmatprep.subr.mxu0 0.0
    %87 = vmatpush2.msra.mxu0 %v41
    %88 = vmatprep.subr.mxu0 0.0
    %89 = vmatpush2.msra.mxu0 %v40
    %90 = vmatprep.subr.mxu0 0.0
    %91 = vmatpush2.msra.mxu0 %v39
    %92 = vmatprep.subr.mxu0 0.0
    %93 = vmatpush2.msra.mxu0 %v38
    %94 = vmatprep.subr.mxu0 0.0
    %95 = vmatpush2.msra.mxu0 %v37
    %96 = vmatprep.subr.mxu0 0.0
    %97 = vmatpush2.msra.mxu0 %v36
    %98 = vmatprep.subr.mxu0 0.0
    %99 = vmatpush2.msra.mxu0 %v35
    %100 = vmatprep.subr.mxu0 0.0
    %101 = vmatpush2.msra.mxu0 %v34
    %102 = vmatprep.subr.mxu0 0.0
    %103 = vmatpush2.msra.mxu0 %v33
    %104 = vmatprep.subr.mxu0 0.0
    %105 = vmatpush2.msra.mxu0 %v32
    %106 = vmatprep.subr.mxu0 0.0
    %107 = vmatpush2.msra.mxu0 %v31
    %108 = vmatprep.subr.mxu0 0.0
    %109 = vmatpush2.msra.mxu0 %v30
    %110 = vmatprep.mubr.f32.mxu0 %v13
    %111 = vmatmul.mubr.f32.gmra.mxu0 %v12
    %v112 = vpop.f32.mrf.mxu0
    %v113 = vadd.f32 0.0, %v112
    %v114 = vpop.f32.mrf.mxu0
    %115 = vdwg.mxu0
    %v116 = vmul.f32 %v113, 0.25
    %vm117 = vcmask 519168
    %118 = vst.msk [vmem:[#allocation2] sm:$0xf] %vm117, %v116
    %119 = vst.msk [vmem:[#allocation2 + $0x4] sm:$0xf] %vm117, 0.0
    %vm120 = vcmask 523268
    %121 = vst.msk [vmem:[#allocation2 + $0x4] sm:$0xf0] %vm120, %v116
    %122 = vst.msk [vmem:[#allocation2 + $0xc] sm:$0xf] %vm117, 0.0
    // Predicated region
    $region10: #{tpu_custom_call.1} parent=1 // pred_check
      _
    $region11: #{tpu_custom_call.1} parent=1 // pred_check_branch
      %124 = sbr.rel (0) target = $region13
    $region12: #{tpu_custom_call.1} parent=1 // pred_region
      %s126 = ssub.s32 256, 256
      %127 = vsyncadd [#allocation3], %s126
      %s128 = sshll.u32 [#allocation2], 4
      %s129 = int_to_ptr.vmem [resolvable:$true] %s128
      %134 = dma.vmem_to_hbm [thread:$0]  %s129, 256, %s2, [#allocation3], 128, 128, 8
    $region13: #{tpu_custom_call.1} parent=1 // pred_fallthru
      _
    // Predicated region
    $region14: #{tpu_custom_call.1} parent=1 // pred_check
      _
    $region15: #{tpu_custom_call.1} parent=1 // pred_check_branch
      %136 = sbr.rel (0) target = $region17
    $region16: #{tpu_custom_call.1} parent=1 // pred_region
      %137 = dma.done [#allocation3], 256
    $region17: #{tpu_custom_call.1} parent=1 // pred_fallthru
      _
    %138 = vsyncpa [#allocation3], 1

// kernel: tpu_custom_call.1
$region0: #{tpu_custom_call.1}
  #allocation0 [shape = 'u32[]', space=smem, size = 0x4, offset = 0x4, fixed_abs, tag = 'smem constant byte address 0x4 - core index']
  #allocation1 [shape = 'u32[144,128]{1,0:T(1,128)}', space=vmem, size = 0x12000, scoped, tag = 'internal scratch']
  %s0 = inlined_call_operand.vmem [shape: f32[256,64], index: 0, kind: input, shape index: {}]
  %s1 = inlined_call_operand.vmem [shape: f32[8,256], index: 1, kind: input, shape index: {}]
  %s2 = inlined_call_operand.hbm [shape: f32[16,64], index: 2, kind: output, shape index: {}]
  %s3 = sld [smem:[#allocation0]]
  $region18: #{tpu_custom_call.1} parent=0
    _
  %s5 = ssub.s32 1, %s3
  %s6 = scalar_select 0, %s5, %s3
  $region1: #{tpu_custom_call.1} parent=0
    #allocation2 [shape = 'u8[8192]{0}', space=vmem, size = 0x2000, scoped, tag = 'output window, operand 0, single buffered']
    #allocation3 [shape = 's32[1]{0}', space=sflag, size = 0x4, scoped, tag = 'scoped memory for tpu_custom_call.1']
    %7 = vsyncpa [#allocation3], 0
    // Predicated region
    $region2: #{tpu_custom_call.1} parent=1 // pred_check
      _
    $region3: #{tpu_custom_call.1} parent=1 // pred_check_branch
      %9 = sbr.rel (0) target = $region5
    $region4: #{tpu_custom_call.1} parent=1 // pred_region
      _
    $region5: #{tpu_custom_call.1} parent=1 // pred_fallthru
      _
    // Predicated region
    $region6: #{tpu_custom_call.1} parent=1 // pred_check
      _
    $region7: #{tpu_custom_call.1} parent=1 // pred_check_branch
      %11 = sbr.rel (0) target = $region9
    $region8: #{tpu_custom_call.1} parent=1 // pred_region
      _
    $region9: #{tpu_custom_call.1} parent=1 // pred_fallthru
      _
    %v12 = vld [vmem:[%s1] sm:$0xff]
    %v13 = vld [vmem:[%s1 + $0x8] sm:$0xff]
    %v14 = vld [vmem:[%s0] sm:$0xff]
    %v15 = vld [vmem:[%s0 + $0x8] sm:$0xff]
    %v16 = vld [vmem:[%s0 + $0x10] sm:$0xff]
    %v17 = vld [vmem:[%s0 + $0x18] sm:$0xff]
    %v18 = vld [vmem:[%s0 + $0x20] sm:$0xff]
    %v19 = vld [vmem:[%s0 + $0x28] sm:$0xff]
    %v20 = vld [vmem:[%s0 + $0x30] sm:$0xff]
    %v21 = vld [vmem:[%s0 + $0x38] sm:$0xff]
    %v22 = vld [vmem:[%s0 + $0x40] sm:$0xff]
    %v23 = vld [vmem:[%s0 + $0x48] sm:$0xff]
    %v24 = vld [vmem:[%s0 + $0x50] sm:$0xff]
    %v25 = vld [vmem:[%s0 + $0x58] sm:$0xff]
    %v26 = vld [vmem:[%s0 + $0x60] sm:$0xff]
    %v27 = vld [vmem:[%s0 + $0x68] sm:$0xff]
    %v28 = vld [vmem:[%s0 + $0x70] sm:$0xff]
    %v29 = vld [vmem:[%s0 + $0x78] sm:$0xff]
    %v30 = vld [vmem:[%s0 + $0x80] sm:$0xff]
    %v31 = vld [vmem:[%s0 + $0x88] sm:$0xff]
    %v32 = vld [vmem:[%s0 + $0x90] sm:$0xff]
    %v33 = vld [vmem:[%s0 + $0x98] sm:$0xff]
    %v34 = vld [vmem:[%s0 + $0xa0] sm:$0xff]
    %v35 = vld [vmem:[%s0 + $0xa8] sm:$0xff]
    %v36 = vld [vmem:[%s0 + $0xb0] sm:$0xff]
    %v37 = vld [vmem:[%s0 + $0xb8] sm:$0xff]
    %v38 = vld [vmem:[%s0 + $0xc0] sm:$0xff]
    %v39 = vld [vmem:[%s0 + $0xc8] sm:$0xff]
    %v40 = vld [vmem:[%s0 + $0xd0] sm:$0xff]
    %v41 = vld [vmem:[%s0 + $0xd8] sm:$0xff]
    %v42 = vld [vmem:[%s0 + $0xe0] sm:$0xff]
    %v43 = vld [vmem:[%s0 + $0xe8] sm:$0xff]
    %v44 = vld [vmem:[%s0 + $0xf0] sm:$0xff]
    %v45 = vld [vmem:[%s0 + $0xf8] sm:$0xff]
    %46 = vmatprep.subr.mxu0 0.0
    %47 = vmatpush1.msra.mxu0 %v29
    %48 = vmatprep.subr.mxu0 0.0
    %49 = vmatpush1.msra.mxu0 %v28
    %50 = vmatprep.subr.mxu0 0.0
    %51 = vmatpush1.msra.mxu0 %v27
    %52 = vmatprep.subr.mxu0 0.0
    %53 = vmatpush1.msra.mxu0 %v26
    %54 = vmatprep.subr.mxu0 0.0
    %55 = vmatpush1.msra.mxu0 %v25
    %56 = vmatprep.subr.mxu0 0.0
    %57 = vmatpush1.msra.mxu0 %v24
    %58 = vmatprep.subr.mxu0 0.0
    %59 = vmatpush1.msra.mxu0 %v23
    %60 = vmatprep.subr.mxu0 0.0
    %61 = vmatpush1.msra.mxu0 %v22
    %62 = vmatprep.subr.mxu0 0.0
    %63 = vmatpush1.msra.mxu0 %v21
    %64 = vmatprep.subr.mxu0 0.0
    %65 = vmatpush1.msra.mxu0 %v20
    %66 = vmatprep.subr.mxu0 0.0
    %67 = vmatpush1.msra.mxu0 %v19
    %68 = vmatprep.subr.mxu0 0.0
    %69 = vmatpush1.msra.mxu0 %v18
    %70 = vmatprep.subr.mxu0 0.0
    %71 = vmatpush1.msra.mxu0 %v17
    %72 = vmatprep.subr.mxu0 0.0
    %73 = vmatpush1.msra.mxu0 %v16
    %74 = vmatprep.subr.mxu0 0.0
    %75 = vmatpush1.msra.mxu0 %v15
    %76 = vmatprep.subr.mxu0 0.0
    %77 = vmatpush1.msra.mxu0 %v14
    %78 = vmatprep.subr.mxu0 0.0
    %79 = vmatpush2.msra.mxu0 %v45
    %80 = vmatprep.subr.mxu0 0.0
    %81 = vmatpush2.msra.mxu0 %v44
    %82 = vmatprep.subr.mxu0 0.0
    %83 = vmatpush2.msra.mxu0 %v43
    %84 = vmatprep.subr.mxu0 0.0
    %85 = vmatpush2.msra.mxu0 %v42
    %86 = vmatprep.subr.mxu0 0.0
    %87 = vmatpush2.msra.mxu0 %v41
    %88 = vmatprep.subr.mxu0 0.0
    %89 = vmatpush2.msra.mxu0 %v40
    %90 = vmatprep.subr.mxu0 0.0
    %91 = vmatpush2.msra.mxu0 %v39
    %92 = vmatprep.subr.mxu0 0.0
    %93 = vmatpush2.msra.mxu0 %v38
    %94 = vmatprep.subr.mxu0 0.0
    %95 = vmatpush2.msra.mxu0 %v37
    %96 = vmatprep.subr.mxu0 0.0
    %97 = vmatpush2.msra.mxu0 %v36
    %98 = vmatprep.subr.mxu0 0.0
    %99 = vmatpush2.msra.mxu0 %v35
    %100 = vmatprep.subr.mxu0 0.0
    %101 = vmatpush2.msra.mxu0 %v34
    %102 = vmatprep.subr.mxu0 0.0
    %103 = vmatpush2.msra.mxu0 %v33
    %104 = vmatprep.subr.mxu0 0.0
    %105 = vmatpush2.msra.mxu0 %v32
    %106 = vmatprep.subr.mxu0 0.0
    %107 = vmatpush2.msra.mxu0 %v31
    %108 = vmatprep.subr.mxu0 0.0
    %109 = vmatpush2.msra.mxu0 %v30
    %110 = vmatprep.mubr.f32.mxu0 %v13
    %111 = vmatmul.mubr.f32.gmra.mxu0 %v12
    %v112 = vpop.f32.mrf.mxu0
    %v113 = vadd.f32 0.0, %v112
    %v114 = vpop.f32.mrf.mxu0
    %115 = vdwg.mxu0
    %v116 = vmul.f32 %v113, 0.25
    %vm117 = vcmask 519168
    %118 = vst.msk [vmem:[#allocation2] sm:$0xf] %vm117, %v116
    %119 = vst.msk [vmem:[#allocation2 + $0x4] sm:$0xf] %vm117, 0.0
    %vm120 = vcmask 523268
    %121 = vst.msk [vmem:[#allocation2 + $0x4] sm:$0xf0] %vm120, %v116
    %122 = vst.msk [vmem:[#allocation2 + $0xc] sm:$0xf] %vm117, 0.0
    // Predicated region
    $region10: #{tpu_custom_call.1} parent=1 // pred_check
      _
    $region11: #{tpu_custom_call.1} parent=1 // pred_check_branch
      %124 = sbr.rel (0) target = $region13
    $region12: #{tpu_custom_call.1} parent=1 // pred_region
      %s126 = ssub.s32 256, 256
      %127 = vsyncadd [#allocation3], %s126
      %s128 = sshll.u32 [#allocation2], 4
      %s129 = int_to_ptr.vmem [resolvable:$true] %s128
      %134 = dma.vmem_to_hbm [thread:$0]  %s129, 256, %s2, [#allocation3], 128, 128, 8
    $region13: #{tpu_custom_call.1} parent=1 // pred_fallthru
      _
    // Predicated region
    $region14: #{tpu_custom_call.1} parent=1 // pred_check
      _
    $region15: #{tpu_custom_call.1} parent=1 // pred_check_branch
      %136 = sbr.rel (0) target = $region17
    $region16: #{tpu_custom_call.1} parent=1 // pred_region
      %137 = dma.done [#allocation3], 256
    $region17: #{tpu_custom_call.1} parent=1 // pred_fallthru
      _
    %138 = vsyncpa [#allocation3], 1

</llo_original>
